<compile_context>
chip_gen: v5e
topology: v5e:2x2
jax: 0.10.0
libtpu: 0.0.40
codegen_flags: <defaults>
</compile_context>

<pallas_src>
import jax
import jax.numpy as jnp
from jax.experimental import pallas as pl
from jax.experimental.pallas import tpu as pltpu


def _program_kernel(x_ref, a1_ref, a0_ref, b1_ref, b0_ref, bias_ref, o_ref):
    # x_ref:                    (TB, CHW)  batch tile (lane-dense)
    # a1/a0/b1/b0/bias refs:    (1,  CHW)  per-lane constants, resident in VMEM
    x = x_ref[...]
    num = a1_ref[...] * x + a0_ref[...]
    den = b1_ref[...] * x + b0_ref[...]
    # EUP approximate reciprocal (~2^-12 rel err) + one Newton refinement step
    # -> ~2^-24 rel err, comfortably inside the 1e-5 tolerance.
    r = pl.reciprocal(den, approx=True)
    r = r * (2.0 - den * r)
    o_ref[...] = num * r + bias_ref[...]


def _choose_batch_tile(batch, chw_pad, target_bytes=4 << 20):
    """Batch tile: ~4 MiB blocks, multiple of 8, >=2 grid steps for B>=16,
    and (when possible) a divisor of B to avoid a partial last block."""
    tb = (target_bytes // (chw_pad * 4)) // 8 * 8
    tb = max(8, tb)
    if batch >= 16:
        # Guarantee at least 2 grid steps so both v7x TensorCores get work.
        half = max(8, (batch // 2) // 8 * 8)
        tb = min(tb, half)
    if tb >= batch:
        return batch  # single full-extent block is always layout-legal
    # Prefer a multiple-of-8 divisor of batch (no partial final block).
    t = tb
    while t > 8 and batch % t != 0:
        t -= 8
    if batch % t == 0:
        return t
    return tb  # no clean divisor; Pallas masks the partial final writeback


@jax.jit
def program_forward(image, P, mean, std):
    """image: (B, C, H, W) f32; P: (C, H, W) f32; mean/std: (C,) f32."""
    B, C, H, W = image.shape
    HW = H * W
    CHW = C * HW

    x_flat = image.reshape(B, CHW).astype(jnp.float32)

    # Precompute tiny (1, CHW) per-lane constants once in the wrapper.
    tp = jnp.tanh(P.astype(jnp.float32)).reshape(CHW)          # tanh(P)
    scale_c = 0.5 / std                                        # (C,)
    bias_c = (0.5 - mean) / std                                # (C,)
    scale = jnp.repeat(scale_c, HW)                            # (CHW,)
    bias = jnp.repeat(bias_c, HW)                              # (CHW,)

    a1 = 2.0 * scale
    a0 = scale * (tp - 1.0)
    b1 = 2.0 * tp
    b0 = 1.0 - tp

    # Lane density: pad CHW up to a multiple of 128 (denominator padded with 1
    # so padded lanes stay finite; result is sliced off afterwards).
    CHW_PAD = ((CHW + 127) // 128) * 128
    if CHW_PAD != CHW:
        pad = CHW_PAD - CHW
        x_flat = jnp.pad(x_flat, ((0, 0), (0, pad)))
        a1 = jnp.pad(a1, (0, pad))
        a0 = jnp.pad(a0, (0, pad))
        b1 = jnp.pad(b1, (0, pad))
        b0 = jnp.pad(b0, (0, pad), constant_values=1.0)
        bias = jnp.pad(bias, (0, pad))

    a1 = a1.reshape(1, CHW_PAD)
    a0 = a0.reshape(1, CHW_PAD)
    b1 = b1.reshape(1, CHW_PAD)
    b0 = b0.reshape(1, CHW_PAD)
    bias = bias.reshape(1, CHW_PAD)

    TB = _choose_batch_tile(B, CHW_PAD)
    grid = (pl.cdiv(B, TB),)

    const_spec = pl.BlockSpec((1, CHW_PAD), lambda b: (0, 0))  # resident

    out_flat = pl.pallas_call(
        _program_kernel,
        out_shape=jax.ShapeDtypeStruct((B, CHW_PAD), jnp.float32),
        grid_spec=pltpu.PrefetchScalarGridSpec(
            num_scalar_prefetch=0,
            grid=grid,
            in_specs=[
                pl.BlockSpec((TB, CHW_PAD), lambda b: (b, 0)),  # image tile
                const_spec, const_spec, const_spec, const_spec, const_spec,
            ],
            out_specs=pl.BlockSpec((TB, CHW_PAD), lambda b: (b, 0)),
        ),
        compiler_params=pltpu.CompilerParams(
            dimension_semantics=("parallel",),
            # 2 x (input + output) 4 MiB blocks + constants; above v5e's 16 MiB
            # scoped default, well inside v7x's 64 MiB physical VMEM.
            vmem_limit_bytes=48 * 1024 * 1024,
        ),
    )(x_flat, a1, a0, b1, b0, bias)

    if CHW_PAD != CHW:
        out_flat = out_flat[:, :CHW]
    return out_flat.reshape(B, C, H, W)


if __name__ == "__main__":
    # Small shapes consistent with the module: cfg.channels=3, h1=w1=16.
    B, C, H, W = 2, 3, 16, 16

    key = jax.random.PRNGKey(0)
    k_img, k_p = jax.random.split(key)

    # Deterministic "parameter" init mirroring torch.rand(...) * 0.0001.
    # TODO(synk): loading a pretrained transform from transform_path has no
    # in-kernel equivalent; P is initialized in-script instead.
    P = jax.random.uniform(k_p, (C, H, W), dtype=jnp.float32) * 0.0001
    # Image in [0, 1) like a normalized input image.
    image = jax.random.uniform(k_img, (B, C, H, W), dtype=jnp.float32)

    mean = jnp.array([0.4914, 0.4822, 0.4465], dtype=jnp.float32)
    std = jnp.array([0.2023, 0.1994, 0.201], dtype=jnp.float32)

    out = program_forward(image, P, mean, std)
    out = jax.block_until_ready(out)

    # Pure-JAX reference reproducing the PyTorch forward exactly.
    x_adv = 2.0 * image - 1.0
    ref = jnp.tanh(
        0.5 * (jnp.log(1.0 + x_adv + 1e-15) - jnp.log(1.0 - x_adv + 1e-15))
        + P[None]
    )
    ref = 0.5 * ref + 0.5
    ref = (ref - mean[None, :, None, None]) / std[None, :, None, None]

    assert out.shape == (B, C, H, W)
    assert jnp.allclose(out, ref, atol=1e-5, rtol=1e-5)
    print("KERNEL_OK")
</pallas_src>

<mosaic_0001>
module attributes {stable_mosaic.version = 11 : i64} {
  func.func @_program_kernel(%arg0: i32, %arg1: memref<2x768xf32, #tpu.memory_space<vmem>>, %arg2: memref<1x768xf32, #tpu.memory_space<vmem>>, %arg3: memref<1x768xf32, #tpu.memory_space<vmem>>, %arg4: memref<1x768xf32, #tpu.memory_space<vmem>>, %arg5: memref<1x768xf32, #tpu.memory_space<vmem>>, %arg6: memref<1x768xf32, #tpu.memory_space<vmem>>, %arg7: memref<2x768xf32, #tpu.memory_space<vmem>>) attributes {dimension_semantics = [#tpu.dimension_semantics<parallel>], iteration_bounds = array<i64: 1>, scalar_prefetch = 0 : i64, scratch_operands = 0 : i64, tpu.core_type = #tpu.core_type<tc>, window_params = [{transform_indices = @transform_0, window_bounds = array<i64: 2, 768>}, {pipeline_mode = #tpu.pipeline_mode<synchronous>, transform_indices = @transform_1, window_bounds = array<i64: 1, 768>}, {pipeline_mode = #tpu.pipeline_mode<synchronous>, transform_indices = @transform_2, window_bounds = array<i64: 1, 768>}, {pipeline_mode = #tpu.pipeline_mode<synchronous>, transform_indices = @transform_3, window_bounds = array<i64: 1, 768>}, {pipeline_mode = #tpu.pipeline_mode<synchronous>, transform_indices = @transform_4, window_bounds = array<i64: 1, 768>}, {pipeline_mode = #tpu.pipeline_mode<synchronous>, transform_indices = @transform_5, window_bounds = array<i64: 1, 768>}, {transform_indices = @transform_6, window_bounds = array<i64: 2, 768>}]} {
    %c0 = arith.constant 0 : index
    %c0_0 = arith.constant 0 : index
    %0 = vector.load %arg1[%c0, %c0_0] : memref<2x768xf32, #tpu.memory_space<vmem>>, vector<2x768xf32>
    %c0_1 = arith.constant 0 : index
    %c0_2 = arith.constant 0 : index
    %1 = vector.load %arg2[%c0_1, %c0_2] : memref<1x768xf32, #tpu.memory_space<vmem>>, vector<1x768xf32>
    %2 = vector.broadcast %1 : vector<1x768xf32> to vector<2x768xf32>
    %3 = arith.mulf %2, %0 : vector<2x768xf32>
    %c0_3 = arith.constant 0 : index
    %c0_4 = arith.constant 0 : index
    %4 = vector.load %arg3[%c0_3, %c0_4] : memref<1x768xf32, #tpu.memory_space<vmem>>, vector<1x768xf32>
    %5 = vector.broadcast %4 : vector<1x768xf32> to vector<2x768xf32>
    %6 = arith.addf %3, %5 : vector<2x768xf32>
    %c0_5 = arith.constant 0 : index
    %c0_6 = arith.constant 0 : index
    %7 = vector.load %arg4[%c0_5, %c0_6] : memref<1x768xf32, #tpu.memory_space<vmem>>, vector<1x768xf32>
    %8 = vector.broadcast %7 : vector<1x768xf32> to vector<2x768xf32>
    %9 = arith.mulf %8, %0 : vector<2x768xf32>
    %c0_7 = arith.constant 0 : index
    %c0_8 = arith.constant 0 : index
    %10 = vector.load %arg5[%c0_7, %c0_8] : memref<1x768xf32, #tpu.memory_space<vmem>>, vector<1x768xf32>
    %11 = vector.broadcast %10 : vector<1x768xf32> to vector<2x768xf32>
    %12 = arith.addf %9, %11 : vector<2x768xf32>
    %13 = tpu.reciprocal %12 {approx = true} : vector<2x768xf32> -> vector<2x768xf32>
    %14 = arith.mulf %12, %13 : vector<2x768xf32>
    %cst = arith.constant 2.000000e+00 : f32
    %15 = vector.broadcast %cst : f32 to vector<2x768xf32>
    %16 = arith.subf %15, %14 : vector<2x768xf32>
    %17 = arith.mulf %13, %16 : vector<2x768xf32>
    %18 = arith.mulf %6, %17 : vector<2x768xf32>
    %c0_9 = arith.constant 0 : index
    %c0_10 = arith.constant 0 : index
    %19 = vector.load %arg6[%c0_9, %c0_10] : memref<1x768xf32, #tpu.memory_space<vmem>>, vector<1x768xf32>
    %20 = vector.broadcast %19 : vector<1x768xf32> to vector<2x768xf32>
    %21 = arith.addf %18, %20 : vector<2x768xf32>
    %c0_11 = arith.constant 0 : index
    %c0_12 = arith.constant 0 : index
    %22 = vector.load %arg7[%c0_11, %c0_12] : memref<2x768xf32, #tpu.memory_space<vmem>>, vector<2x768xf32>
    tpu.vector_store %arg7[%c0_11, %c0_12], %21 {strides = array<i32>} : memref<2x768xf32, #tpu.memory_space<vmem>>, vector<2x768xf32>,
    return
  }
  func.func @transform_0(%arg0: i32) -> (i32, i32) {
    %c0_i32 = arith.constant 0 : i32
    %c0_i32_0 = arith.constant 0 : i32
    return %arg0, %c0_i32 : i32, i32
  }
  func.func @transform_1(%arg0: i32) -> (i32, i32) {
    %c0_i32 = arith.constant 0 : i32
    %c0_i32_0 = arith.constant 0 : i32
    %c0_i32_1 = arith.constant 0 : i32
    return %c0_i32, %c0_i32_0 : i32, i32
  }
  func.func @transform_2(%arg0: i32) -> (i32, i32) {
    %c0_i32 = arith.constant 0 : i32
    %c0_i32_0 = arith.constant 0 : i32
    %c0_i32_1 = arith.constant 0 : i32
    return %c0_i32, %c0_i32_0 : i32, i32
  }
  func.func @transform_3(%arg0: i32) -> (i32, i32) {
    %c0_i32 = arith.constant 0 : i32
    %c0_i32_0 = arith.constant 0 : i32
    %c0_i32_1 = arith.constant 0 : i32
    return %c0_i32, %c0_i32_0 : i32, i32
  }
  func.func @transform_4(%arg0: i32) -> (i32, i32) {
    %c0_i32 = arith.constant 0 : i32
    %c0_i32_0 = arith.constant 0 : i32
    %c0_i32_1 = arith.constant 0 : i32
    return %c0_i32, %c0_i32_0 : i32, i32
  }
  func.func @transform_5(%arg0: i32) -> (i32, i32) {
    %c0_i32 = arith.constant 0 : i32
    %c0_i32_0 = arith.constant 0 : i32
    %c0_i32_1 = arith.constant 0 : i32
    return %c0_i32, %c0_i32_0 : i32, i32
  }
  func.func @transform_6(%arg0: i32) -> (i32, i32) {
    %c0_i32 = arith.constant 0 : i32
    %c0_i32_0 = arith.constant 0 : i32
    return %arg0, %c0_i32 : i32, i32
  }
}

</mosaic_0001>

<llo_original>
// kernel: program_forward.1
$region0: #{program_forward.1}
  #allocation0 [shape = 'u32[]', space=smem, size = 0x4, offset = 0x4, fixed_abs, tag = 'smem constant byte address 0x4 - core index']
  #allocation1 [shape = 'u32[72,128]{1,0:T(1,128)}', space=vmem, size = 0x9000, scoped, tag = 'internal scratch']
  %s0 = inlined_call_operand.vmem [shape: f32[2,768], index: 0, kind: input, shape index: {}]
  %s1 = inlined_call_operand.vmem [shape: f32[1,768], index: 1, kind: input, shape index: {}]
  %s2 = inlined_call_operand.vmem [shape: f32[1,768], index: 2, kind: input, shape index: {}]
  %s3 = inlined_call_operand.vmem [shape: f32[1,768], index: 3, kind: input, shape index: {}]
  %s4 = inlined_call_operand.vmem [shape: f32[1,768], index: 4, kind: input, shape index: {}]
  %s5 = inlined_call_operand.vmem [shape: f32[1,768], index: 5, kind: input, shape index: {}]
  %s6 = inlined_call_operand.vmem [shape: f32[2,768], index: 6, kind: output, shape index: {}]
  %s7 = sld [smem:[#allocation0]]
  $region34: #{program_forward.1} parent=0
    _
  %s9 = ssub.s32 1, %s7
  %s10 = scalar_select 0, %s9, %s7
  // Predicated region
  $region2: #{program_forward.1} parent=0 // pred_check
    _
  $region3: #{program_forward.1} parent=0 // pred_check_branch
    %12 = sbr.rel (0) target = $region5
  $region4: #{program_forward.1} parent=0 // pred_region
    _
  $region5: #{program_forward.1} parent=0 // pred_fallthru
    _
  // Predicated region
  $region6: #{program_forward.1} parent=0 // pred_check
    _
  $region7: #{program_forward.1} parent=0 // pred_check_branch
    %14 = sbr.rel (0) target = $region9
  $region8: #{program_forward.1} parent=0 // pred_region
    _
  $region9: #{program_forward.1} parent=0 // pred_fallthru
    _
  // Predicated region
  $region10: #{program_forward.1} parent=0 // pred_check
    _
  $region11: #{program_forward.1} parent=0 // pred_check_branch
    %16 = sbr.rel (0) target = $region13
  $region12: #{program_forward.1} parent=0 // pred_region
    _
  $region13: #{program_forward.1} parent=0 // pred_fallthru
    _
  // Predicated region
  $region14: #{program_forward.1} parent=0 // pred_check
    _
  $region15: #{program_forward.1} parent=0 // pred_check_branch
    %18 = sbr.rel (0) target = $region17
  $region16: #{program_forward.1} parent=0 // pred_region
    _
  $region17: #{program_forward.1} parent=0 // pred_fallthru
    _
  // Predicated region
  $region18: #{program_forward.1} parent=0 // pred_check
    _
  $region19: #{program_forward.1} parent=0 // pred_check_branch
    %20 = sbr.rel (0) target = $region21
  $region20: #{program_forward.1} parent=0 // pred_region
    _
  $region21: #{program_forward.1} parent=0 // pred_fallthru
    _
  // Predicated region
  $region22: #{program_forward.1} parent=0 // pred_check
    _
  $region23: #{program_forward.1} parent=0 // pred_check_branch
    %22 = sbr.rel (0) target = $region25
  $region24: #{program_forward.1} parent=0 // pred_region
    _
  $region25: #{program_forward.1} parent=0 // pred_fallthru
    _
  %v23 = vld [vmem:[%s0] sm:$0xff]
  %v24 = vld [vmem:[%s0 + $0x8] sm:$0xf]
  %v25 = vld [vmem:[%s1] sm:$0x3f]
  %v27 = vperm.slane %v25, 0
  %v28 = vperm.slane %v25, 1
  %v29 = vperm.slane %v25, 2
  %v30 = vperm.slane %v25, 3
  %v31 = vperm.slane %v25, 4
  %v32 = vperm.slane %v25, 5
  %41 = vst [vmem:[#allocation1] ss:$4 sm:$0xff] %v23
  %s42 = scalar_lea.vmem [#allocation1], 32
  %43 = vst [vmem:[%s42] ss:$4 sm:$0xff] %v24
  %v44 = vld.sshfl [vmem:[#allocation1] sm:$0xff pattern:$0x73625140]
  %v45 = vld.sshfl [vmem:[#allocation1 + $0x8] sm:$0xff pattern:$0x73625140]
  %v46 = vld.sshfl [vmem:[#allocation1 + $0x10] sm:$0xff pattern:$0x73625140]
  %v47 = vld.sshfl [vmem:[#allocation1 + $0x18] sm:$0xff pattern:$0x73625140]
  %v48 = vld.sshfl [vmem:[#allocation1 + $0x20] sm:$0xff pattern:$0x73625140]
  %v49 = vld.sshfl [vmem:[#allocation1 + $0x28] sm:$0xff pattern:$0x73625140]
  %v56 = vmul.f32 %v27, %v44
  %v57 = vmul.f32 %v28, %v45
  %v58 = vmul.f32 %v29, %v46
  %v59 = vmul.f32 %v30, %v47
  %v60 = vmul.f32 %v31, %v48
  %v61 = vmul.f32 %v32, %v49
  %v62 = vld [vmem:[%s2] sm:$0x3f]
  %v64 = vperm.slane %v62, 0
  %v65 = vperm.slane %v62, 1
  %v66 = vperm.slane %v62, 2
  %v67 = vperm.slane %v62, 3
  %v68 = vperm.slane %v62, 4
  %v69 = vperm.slane %v62, 5
  %v76 = vadd.f32 %v56, %v64
  %v77 = vadd.f32 %v57, %v65
  %v78 = vadd.f32 %v58, %v66
  %v79 = vadd.f32 %v59, %v67
  %v80 = vadd.f32 %v60, %v68
  %v81 = vadd.f32 %v61, %v69
  %v82 = vld [vmem:[%s3] sm:$0x3f]
  %v84 = vperm.slane %v82, 0
  %v85 = vperm.slane %v82, 1
  %v86 = vperm.slane %v82, 2
  %v87 = vperm.slane %v82, 3
  %v88 = vperm.slane %v82, 4
  %v89 = vperm.slane %v82, 5
  %96 = vst [vmem:[#allocation1] ss:$4 sm:$0xff] %v23
  %s97 = scalar_lea.vmem [#allocation1], 32
  %98 = vst [vmem:[%s97] ss:$4 sm:$0xff] %v24
  %v99 = vld.sshfl [vmem:[#allocation1] sm:$0xff pattern:$0x73625140]
  %v100 = vld.sshfl [vmem:[#allocation1 + $0x8] sm:$0xff pattern:$0x73625140]
  %v101 = vld.sshfl [vmem:[#allocation1 + $0x10] sm:$0xff pattern:$0x73625140]
  %v102 = vld.sshfl [vmem:[#allocation1 + $0x18] sm:$0xff pattern:$0x73625140]
  %v103 = vld.sshfl [vmem:[#allocation1 + $0x20] sm:$0xff pattern:$0x73625140]
  %v104 = vld.sshfl [vmem:[#allocation1 + $0x28] sm:$0xff pattern:$0x73625140]
  %v111 = vmul.f32 %v84, %v99
  %v112 = vmul.f32 %v85, %v100
  %v113 = vmul.f32 %v86, %v101
  %v114 = vmul.f32 %v87, %v102
  %v115 = vmul.f32 %v88, %v103
  %v116 = vmul.f32 %v89, %v104
  %v117 = vld [vmem:[%s4] sm:$0x3f]
  %v119 = vperm.slane %v117, 0
  %v120 = vperm.slane %v117, 1
  %v121 = vperm.slane %v117, 2
  %v122 = vperm.slane %v117, 3
  %v123 = vperm.slane %v117, 4
  %v124 = vperm.slane %v117, 5
  %v131 = vadd.f32 %v111, %v119
  %v132 = vadd.f32 %v112, %v120
  %v133 = vadd.f32 %v113, %v121
  %v134 = vadd.f32 %v114, %v122
  %v135 = vadd.f32 %v115, %v123
  %v136 = vadd.f32 %v116, %v124
  %v137 = vrcp.pop %v131
  %v138 = vrcp.pop %v132
  %v139 = vrcp.pop %v133
  %v140 = vrcp.pop %v134
  %v141 = vrcp.pop %v135
  %v142 = vrcp.pop %v136
  %v143 = vmul.f32 %v131, %v137
  %v144 = vmul.f32 %v132, %v138
  %v145 = vmul.f32 %v133, %v139
  %v146 = vmul.f32 %v134, %v140
  %v147 = vmul.f32 %v135, %v141
  %v148 = vmul.f32 %v136, %v142
  %v149 = vsub.f32 2.0, %v143
  %v150 = vsub.f32 2.0, %v144
  %v151 = vsub.f32 2.0, %v145
  %v152 = vsub.f32 2.0, %v146
  %v153 = vsub.f32 2.0, %v147
  %v154 = vsub.f32 2.0, %v148
  %v155 = vmul.f32 %v137, %v149
  %v156 = vmul.f32 %v138, %v150
  %v157 = vmul.f32 %v139, %v151
  %v158 = vmul.f32 %v140, %v152
  %v159 = vmul.f32 %v141, %v153
  %v160 = vmul.f32 %v142, %v154
  %v161 = vmul.f32 %v76, %v155
  %v162 = vmul.f32 %v77, %v156
  %v163 = vmul.f32 %v78, %v157
  %v164 = vmul.f32 %v79, %v158
  %v165 = vmul.f32 %v80, %v159
  %v166 = vmul.f32 %v81, %v160
  %v167 = vld [vmem:[%s5] sm:$0x3f]
  %v169 = vperm.slane %v167, 0
  %v170 = vperm.slane %v167, 1
  %v171 = vperm.slane %v167, 2
  %v172 = vperm.slane %v167, 3
  %v173 = vperm.slane %v167, 4
  %v174 = vperm.slane %v167, 5
  %v181 = vadd.f32 %v161, %v169
  %v182 = vadd.f32 %v162, %v170
  %v183 = vadd.f32 %v163, %v171
  %v184 = vadd.f32 %v164, %v172
  %v185 = vadd.f32 %v165, %v173
  %v186 = vadd.f32 %v166, %v174
  %v193 = vrot.slane %v182, 6
  %v194 = vrot.slane %v183, 4
  %v195 = vrot.slane %v184, 2
  %v196 = vrot.slane %v186, 6
  %vm197 = vcmask 1041408
  %v198 = vsel %vm197, %v181, %v193
  %vm199 = vcmask 1045508
  %v200 = vsel %vm199, %v194, %v195
  %vm201 = vcmask 1043456
  %v202 = vsel %vm201, %v198, %v200
  %v203 = vsel %vm197, %v185, %v196
  %206 = vst [vmem:[%s6] sm:$0xff] %v202
  %207 = vst [vmem:[%s6 + $0x8] sm:$0xf] %v203
  // Predicated region
  $region26: #{program_forward.1} parent=0 // pred_check
    _
  $region27: #{program_forward.1} parent=0 // pred_check_branch
    %209 = sbr.rel (0) target = $region29
  $region28: #{program_forward.1} parent=0 // pred_region
    _
  $region29: #{program_forward.1} parent=0 // pred_fallthru
    _
  // Predicated region
  $region30: #{program_forward.1} parent=0 // pred_check
    _
  $region31: #{program_forward.1} parent=0 // pred_check_branch
    %211 = sbr.rel (0) target = $region33
  $region32: #{program_forward.1} parent=0 // pred_region
    _
  $region33: #{program_forward.1} parent=0 // pred_fallthru
    _

</llo_original>
